<compile_context>
chip_gen: v6e
topology: v6e:2x2x1
jax: 0.10.0
libtpu: 0.0.40
codegen_flags: <defaults>
</compile_context>

<pallas_src>
import jax
import jax.numpy as jnp
from jax import lax
from jax.experimental import pallas as pl
from jax.experimental.pallas import tpu as pltpu


# ----------------------------- Pallas kernel ------------------------------ #

def _diff_fnn_kernel(lam_ref, p0_ref, w_ref, out_ref):
    """One grid step == L layers:  P <- soft_threshold(P @ W[k].T, lam)."""
    step = pl.program_id(0)
    lam = lam_ref[0]                        # scalar from SMEM

    @pl.when(step == 0)
    def _():
        out_ref[...] = p0_ref[...]          # out block stays resident across steps

    p = out_ref[...]                        # [classes, dim] f32 (VMEM-resident)
    layers_per_step = w_ref.shape[0]
    # Static (trace-time) unroll over the layers packed into this grid step.
    for i in range(layers_per_step):
        w = w_ref[i]                        # [dim, dim] (bf16 as prepared)
        # y = p @ W.T : contract dim 1 of p with dim 1 of W (nn.Linear
        # convention) -- transpose fused into the MXU contraction.
        z = lax.dot_general(p.astype(w.dtype), w,
                            dimension_numbers=(((1,), (1,)), ((), ())),
                            preferred_element_type=jnp.float32)
        # soft threshold: relu(z - lam) - relu(-z - lam)
        # (two-relu form kept: exact for any sign of the learned lam)
        p = jnp.maximum(z - lam, 0.0) - jnp.maximum(-z - lam, 0.0)

    out_ref[...] = p


def prepare_weights(W):
    """One-time cast of the stacked nn.Linear weights to bf16 for streaming.

    Do this ONCE (e.g. at parameter-load time), NOT inside the per-call
    forward -- otherwise the convert pass triples weight HBM traffic."""
    return jnp.asarray(W, jnp.bfloat16)


def _choose_layers_per_step(n_layers, dim, w_itemsize,
                            weight_vmem_budget=8 << 20):
    """Pick how many layers to pack per grid step.

    If all weights fit the (conservative) budget, collapse the grid entirely.
    Otherwise pick the largest divisor of n_layers whose Buffered(3) weight
    blocks stay inside the budget (budget kept well under v7x's 64 MiB / v5e's
    16 MiB-default scoped VMEM)."""
    layer_bytes = dim * dim * w_itemsize
    if n_layers * layer_bytes <= weight_vmem_budget:
        return n_layers
    for L in range(n_layers, 0, -1):
        if n_layers % L == 0 and 3 * L * layer_bytes <= weight_vmem_budget:
            return L
    return 1


def diff_fnn_forward(P0, W, lam):
    """P0: [classes, dim] f32; W: [n_layers, dim, dim] (pass bf16 prepared via
    prepare_weights; streamed in whatever dtype is given, no per-call cast);
    lam: scalar f32.  Returns the final P (f32), matching Diff_FNN.forward."""
    n_layers, dim, _ = W.shape
    classes = P0.shape[0]
    lam_arr = jnp.asarray(lam, jnp.float32).reshape((1,))
    w_itemsize = jnp.dtype(W.dtype).itemsize

    layers_per_step = _choose_layers_per_step(n_layers, dim, w_itemsize)
    assert n_layers % layers_per_step == 0
    num_steps = n_layers // layers_per_step

    # W spec: (layers_per_step, dim, dim) blocks streamed along the layer axis.
    # Deepen the pipeline only when there is actually a multi-step grid.
    if num_steps > 1:
        w_spec = pl.BlockSpec((layers_per_step, dim, dim),
                              lambda k: (k, 0, 0),
                              pipeline_mode=pl.Buffered(3))
        n_w_buf = 3
    else:
        w_spec = pl.BlockSpec((layers_per_step, dim, dim),
                              lambda k: (k, 0, 0))
        n_w_buf = 1

    # Explicit scoped-VMEM limit derived from the real footprint:
    #   weights (pipelined) + P0 tile + resident out tile, with slack.
    # Capped at 64 MiB (v7x physical ceiling); floor of 16 MiB keeps it at or
    # below every generation's default for the small case.
    weight_vmem = n_w_buf * layers_per_step * dim * dim * w_itemsize
    p_vmem = 2 * (classes * dim * 4)
    vmem_limit = int(min(max(2 * (weight_vmem + p_vmem) + (1 << 20), 16 << 20),
                         64 << 20))

    # True HBM traffic: each weight element read once at its streamed
    # itemsize, P0 read once, P written once.
    flops = 2 * n_layers * classes * dim * dim
    bytes_accessed = (n_layers * dim * dim * w_itemsize
                      + 2 * classes * dim * 4)

    return pl.pallas_call(
        _diff_fnn_kernel,
        out_shape=jax.ShapeDtypeStruct((classes, dim), jnp.float32),
        grid=(num_steps,),
        in_specs=[
            pl.BlockSpec(memory_space=pltpu.MemorySpace.SMEM),   # lam scalar
            pl.BlockSpec((classes, dim), lambda k: (0, 0)),      # P0
            w_spec,                                              # W[k] block
        ],
        # Same block index for every step -> P stays in VMEM for the whole
        # grid and is written back to HBM only after the last layer.
        out_specs=pl.BlockSpec((classes, dim), lambda k: (0, 0)),
        compiler_params=pltpu.CompilerParams(
            # layer axis is a sequential dependency chain
            dimension_semantics=("arbitrary",),
            vmem_limit_bytes=vmem_limit),
        cost_estimate=pl.CostEstimate(flops=flops, transcendentals=0,
                                      bytes_accessed=bytes_accessed),
    )(lam_arr, P0, W)


# -------------------------- JAX glue (preprocessing) ----------------------- #

def firing_level(data, centers, delta):
    """Gaussian firing strength.  data [N,D], centers/delta [C,D] -> [N,C]."""
    d = -((data[:, :, None] - centers.T[None, :, :]) ** 2) / (2.0 * delta.T[None, :, :])
    d = jnp.exp(jnp.sum(d, axis=1))                      # [N, C]
    d = jnp.maximum(d, jnp.finfo(jnp.float32).eps)
    return d / jnp.sum(d, axis=1, keepdims=True)


def x2xp(X, mem):
    """TSK first-order consequent input.  X [N,D], mem [N,C] -> [N,(D+1)*C]."""
    n = X.shape[0]
    mem = mem[:, None, :]                                # [N,1,C]
    xa = jnp.concatenate([X, jnp.ones((n, 1), X.dtype)], axis=1)[:, :, None]
    xp = xa * mem                                        # [N, D+1, C]
    return xp.reshape(n, -1)


# ------------------------------- references -------------------------------- #

def ref_forward_bf16(p0, w, lam_):
    """Plain-JAX mirror of the kernel numerics (bf16 operands, f32 accum)."""
    wb = w.astype(jnp.bfloat16)
    p = p0
    for k in range(w.shape[0]):
        z = jnp.dot(p.astype(jnp.bfloat16), wb[k].T,
                    preferred_element_type=jnp.float32)
        p = jnp.maximum(z - lam_, 0.0) - jnp.maximum(-z - lam_, 0.0)
    return p


def ref_forward_f32(p0, w, lam_):
    """Plain-JAX mirror of the original f32 Diff_FNN.forward."""
    p = p0
    for k in range(w.shape[0]):
        z = p @ w[k].T
        p = jnp.maximum(z - lam_, 0.0) - jnp.maximum(-z - lam_, 0.0)
    return p


# --------------------------------- main ------------------------------------ #

if __name__ == "__main__":
    key = jax.random.PRNGKey(0)
    k1, k2, k3, k4, k5 = jax.random.split(key, 5)

    # Small, module-consistent shapes.
    n_samples, n_features = 16, 15
    n_rules = 8
    n_layers = 3
    classes = 8
    dim = (n_features + 1) * n_rules      # = 128 (TSK consequent dimension)

    data = jax.random.normal(k1, (n_samples, n_features), jnp.float32)

    # TODO(synk): ESSC fuzzy clustering (__cluster__) has no clean Pallas/JAX
    # equivalent here; deterministic pseudo centers/variances stand in.
    centers = jax.random.normal(k2, (n_rules, n_features), jnp.float32)
    variance = jax.random.uniform(k3, (n_rules, n_features), jnp.float32,
                                  minval=0.5, maxval=1.5)

    mem = firing_level(data, centers, variance)
    xp = x2xp(data, mem)                  # self.xp, passed through forward
    assert xp.shape == (n_samples, dim)

    # Deterministic parameters (shapes from __init__): n_layers Linear(dim,dim,
    # bias=False) weights and lam (init 0, as nn.Parameter([0])).
    W = 0.05 * jax.random.normal(k4, (n_layers, dim, dim), jnp.float32)
    P0 = jax.random.uniform(k5, (classes, dim), jnp.float32)
    lam = jnp.float32(0.0)

    # One-time weight preparation (bf16 streaming format) -- outside the
    # per-call forward path.
    Wb = prepare_weights(W)

    # Run the Pallas kernel (forward pass).
    P = jax.block_until_ready(diff_fnn_forward(P0, Wb, lam))
    xp = jax.block_until_ready(xp)

    # Strict check vs a reference that mirrors the kernel's bf16-weight path.
    assert jnp.allclose(P, ref_forward_bf16(P0, W, lam), atol=5e-3, rtol=5e-3)
    # Loose sanity check vs the original full-f32 forward (bf16 quantization
    # of the weights accounts for the residual difference; fine at 3 layers).
    assert jnp.allclose(P, ref_forward_f32(P0, W, lam), atol=2e-2, rtol=2e-1)
    assert bool(jnp.all(jnp.isfinite(P)))

    # Also exercise the nontrivial soft-threshold branch with lam != 0.
    lam2 = jnp.float32(0.1)
    P2 = jax.block_until_ready(diff_fnn_forward(P0, Wb, lam2))
    assert jnp.allclose(P2, ref_forward_bf16(P0, W, lam2), atol=5e-3, rtol=5e-3)
    assert jnp.allclose(P2, ref_forward_f32(P0, W, lam2), atol=2e-2, rtol=2e-1)

    print("KERNEL_OK")
</pallas_src>

<mosaic_0001>
module attributes {stable_mosaic.version = 11 : i64} {
  func.func @_diff_fnn_kernel(%arg0: i32, %arg1: memref<1xf32, #tpu.memory_space<smem>>, %arg2: memref<8x128xf32, #tpu.memory_space<vmem>>, %arg3: memref<3x128x128xbf16, #tpu.memory_space<vmem>>, %arg4: memref<8x128xf32, #tpu.memory_space<vmem>>) attributes {dimension_semantics = [#tpu.dimension_semantics<arbitrary>], iteration_bounds = array<i64: 1>, scalar_prefetch = 0 : i64, scratch_operands = 0 : i64, tpu.core_type = #tpu.core_type<tc>, window_params = [{transform_indices = @transform_0, window_bounds = array<i64: 1>}, {pipeline_mode = #tpu.pipeline_mode<synchronous>, transform_indices = @transform_1, window_bounds = array<i64: 8, 128>}, {transform_indices = @transform_2, window_bounds = array<i64: 3, 128, 128>}, {pipeline_mode = #tpu.pipeline_mode<synchronous>, transform_indices = @transform_3, window_bounds = array<i64: 8, 128>}]} {
    %c0 = arith.constant 0 : index
    %0 = memref.load %arg1[%c0] : memref<1xf32, #tpu.memory_space<smem>>
    %c0_i32 = arith.constant 0 : i32
    %1 = arith.cmpi eq, %arg0, %c0_i32 : i32
    %2 = arith.extui %1 : i1 to i32
    %c0_i32_0 = arith.constant 0 : i32
    %3 = arith.cmpi ne, %2, %c0_i32_0 : i32
    scf.if %3 {
      %c0_23 = arith.constant 0 : index
      %c0_24 = arith.constant 0 : index
      %51 = vector.load %arg2[%c0_23, %c0_24] : memref<8x128xf32, #tpu.memory_space<vmem>>, vector<8x128xf32>
      %c0_25 = arith.constant 0 : index
      %c0_26 = arith.constant 0 : index
      %52 = vector.load %arg4[%c0_25, %c0_26] : memref<8x128xf32, #tpu.memory_space<vmem>>, vector<8x128xf32>
      tpu.vector_store %arg4[%c0_25, %c0_26], %51 {strides = array<i32>} : memref<8x128xf32, #tpu.memory_space<vmem>>, vector<8x128xf32>,
    } else {
    }
    %c0_1 = arith.constant 0 : index
    %c0_2 = arith.constant 0 : index
    %4 = vector.load %arg4[%c0_1, %c0_2] : memref<8x128xf32, #tpu.memory_space<vmem>>, vector<8x128xf32>
    %c0_3 = arith.constant 0 : index
    %c0_4 = arith.constant 0 : index
    %c0_5 = arith.constant 0 : index
    %5 = vector.load %arg3[%c0_3, %c0_4, %c0_5] : memref<3x128x128xbf16, #tpu.memory_space<vmem>>, vector<1x128x128xbf16>
    %6 = vector.shape_cast %5 : vector<1x128x128xbf16> to vector<128x128xbf16>
    %7 = arith.truncf %4 : vector<8x128xf32> to vector<8x128xbf16>
    %cst = arith.constant dense<0.000000e+00> : vector<8x128xf32>
    %8 = tpu.matmul %7, %6, %cst {dimension_numbers = #tpu.dot_dimension_numbers<[1], [1], [0], [0], [0, 0, 1, 0], [], []>} : vector<8x128xbf16>, vector<128x128xbf16>, vector<8x128xf32> -> vector<8x128xf32>
    %9 = vector.broadcast %0 : f32 to vector<8x128xf32>
    %10 = arith.subf %8, %9 : vector<8x128xf32>
    %cst_6 = arith.constant 0.000000e+00 : f32
    %11 = vector.broadcast %cst_6 : f32 to vector<8x128xf32>
    %12 = arith.maximumf %10, %11 : vector<8x128xf32>
    %cst_7 = arith.constant 0.000000e+00 : f32
    %13 = vector.broadcast %cst_7 : f32 to vector<8x128xf32>
    %14 = arith.subf %13, %8 : vector<8x128xf32>
    %15 = vector.broadcast %0 : f32 to vector<8x128xf32>
    %16 = arith.subf %14, %15 : vector<8x128xf32>
    %cst_8 = arith.constant 0.000000e+00 : f32
    %17 = vector.broadcast %cst_8 : f32 to vector<8x128xf32>
    %18 = arith.maximumf %16, %17 : vector<8x128xf32>
    %19 = arith.subf %12, %18 : vector<8x128xf32>
    %c1 = arith.constant 1 : index
    %c0_9 = arith.constant 0 : index
    %c0_10 = arith.constant 0 : index
    %20 = vector.load %arg3[%c1, %c0_9, %c0_10] : memref<3x128x128xbf16, #tpu.memory_space<vmem>>, vector<1x128x128xbf16>
    %21 = vector.shape_cast %20 : vector<1x128x128xbf16> to vector<128x128xbf16>
    %22 = arith.truncf %19 : vector<8x128xf32> to vector<8x128xbf16>
    %cst_11 = arith.constant dense<0.000000e+00> : vector<8x128xf32>
    %23 = tpu.matmul %22, %21, %cst_11 {dimension_numbers = #tpu.dot_dimension_numbers<[1], [1], [0], [0], [0, 0, 1, 0], [], []>} : vector<8x128xbf16>, vector<128x128xbf16>, vector<8x128xf32> -> vector<8x128xf32>
    %24 = vector.broadcast %0 : f32 to vector<8x128xf32>
    %25 = arith.subf %23, %24 : vector<8x128xf32>
    %cst_12 = arith.constant 0.000000e+00 : f32
    %26 = vector.broadcast %cst_12 : f32 to vector<8x128xf32>
    %27 = arith.maximumf %25, %26 : vector<8x128xf32>
    %cst_13 = arith.constant 0.000000e+00 : f32
    %28 = vector.broadcast %cst_13 : f32 to vector<8x128xf32>
    %29 = arith.subf %28, %23 : vector<8x128xf32>
    %30 = vector.broadcast %0 : f32 to vector<8x128xf32>
    %31 = arith.subf %29, %30 : vector<8x128xf32>
    %cst_14 = arith.constant 0.000000e+00 : f32
    %32 = vector.broadcast %cst_14 : f32 to vector<8x128xf32>
    %33 = arith.maximumf %31, %32 : vector<8x128xf32>
    %34 = arith.subf %27, %33 : vector<8x128xf32>
    %c2 = arith.constant 2 : index
    %c0_15 = arith.constant 0 : index
    %c0_16 = arith.constant 0 : index
    %35 = vector.load %arg3[%c2, %c0_15, %c0_16] : memref<3x128x128xbf16, #tpu.memory_space<vmem>>, vector<1x128x128xbf16>
    %36 = vector.shape_cast %35 : vector<1x128x128xbf16> to vector<128x128xbf16>
    %37 = arith.truncf %34 : vector<8x128xf32> to vector<8x128xbf16>
    %cst_17 = arith.constant dense<0.000000e+00> : vector<8x128xf32>
    %38 = tpu.matmul %37, %36, %cst_17 {dimension_numbers = #tpu.dot_dimension_numbers<[1], [1], [0], [0], [0, 0, 1, 0], [], []>} : vector<8x128xbf16>, vector<128x128xbf16>, vector<8x128xf32> -> vector<8x128xf32>
    %39 = vector.broadcast %0 : f32 to vector<8x128xf32>
    %40 = arith.subf %38, %39 : vector<8x128xf32>
    %cst_18 = arith.constant 0.000000e+00 : f32
    %41 = vector.broadcast %cst_18 : f32 to vector<8x128xf32>
    %42 = arith.maximumf %40, %41 : vector<8x128xf32>
    %cst_19 = arith.constant 0.000000e+00 : f32
    %43 = vector.broadcast %cst_19 : f32 to vector<8x128xf32>
    %44 = arith.subf %43, %38 : vector<8x128xf32>
    %45 = vector.broadcast %0 : f32 to vector<8x128xf32>
    %46 = arith.subf %44, %45 : vector<8x128xf32>
    %cst_20 = arith.constant 0.000000e+00 : f32
    %47 = vector.broadcast %cst_20 : f32 to vector<8x128xf32>
    %48 = arith.maximumf %46, %47 : vector<8x128xf32>
    %49 = arith.subf %42, %48 : vector<8x128xf32>
    %c0_21 = arith.constant 0 : index
    %c0_22 = arith.constant 0 : index
    %50 = vector.load %arg4[%c0_21, %c0_22] : memref<8x128xf32, #tpu.memory_space<vmem>>, vector<8x128xf32>
    tpu.vector_store %arg4[%c0_21, %c0_22], %49 {strides = array<i32>} : memref<8x128xf32, #tpu.memory_space<vmem>>, vector<8x128xf32>,
    return
  }
  func.func @transform_0(%arg0: i32) -> i32 {
    %c0_i32 = arith.constant 0 : i32
    %c0_i32_0 = arith.constant 0 : i32
    return %c0_i32 : i32
  }
  func.func @transform_1(%arg0: i32) -> (i32, i32) {
    %c0_i32 = arith.constant 0 : i32
    %c0_i32_0 = arith.constant 0 : i32
    %c0_i32_1 = arith.constant 0 : i32
    return %c0_i32, %c0_i32_0 : i32, i32
  }
  func.func @transform_2(%arg0: i32) -> (i32, i32, i32) {
    %c0_i32 = arith.constant 0 : i32
    %c0_i32_0 = arith.constant 0 : i32
    %c0_i32_1 = arith.constant 0 : i32
    return %arg0, %c0_i32, %c0_i32_0 : i32, i32, i32
  }
  func.func @transform_3(%arg0: i32) -> (i32, i32) {
    %c0_i32 = arith.constant 0 : i32
    %c0_i32_0 = arith.constant 0 : i32
    %c0_i32_1 = arith.constant 0 : i32
    return %c0_i32, %c0_i32_0 : i32, i32
  }
}

</mosaic_0001>

<llo_original>
// kernel: tpu_custom_call.1
$region0: #{tpu_custom_call.1}
  #allocation0 [shape = 'u32[]', space=smem, size = 0x4, offset = 0x4, fixed_abs, tag = 'smem constant byte address 0x4 - core index']
  #allocation1 [shape = 'u32[144,128]{1,0:T(1,128)}', space=vmem, size = 0x12000, scoped, tag = 'internal scratch']
  #allocation2 [shape = 'f32[1]{0:T(128)S(6)}', space=smem, size = 0x200, scoped, tag = 'scoped memory for tpu_custom_call.1']
  %s0 = inlined_call_operand.<no memory space> [shape: f32[1], index: 0, kind: input, shape index: {}]
  %s1 = inlined_call_operand.hbm [shape: f32[8,128], index: 1, kind: input, shape index: {}]
  %s2 = inlined_call_operand.hbm [shape: bf16[3,128,128], index: 2, kind: input, shape index: {}]
  %s3 = inlined_call_operand.hbm [shape: f32[8,128], index: 3, kind: output, shape index: {}]
  %s4 = sld [smem:[#allocation0]]
  $region34: #{tpu_custom_call.1} parent=0
    _
  %s6 = ssub.s32 1, %s4
  %s7 = scalar_select 0, %s6, %s4
  %8 = sst [smem:[#allocation2]] %s0
  $region1: #{tpu_custom_call.1} parent=0
    #allocation3 [shape = 'u8[4096]{0}', space=vmem, size = 0x1000, scoped, tag = 'input window, operand 1, single buffered']
    #allocation4 [shape = 's32[1]{0}', space=sflag, size = 0x4, scoped, tag = 'scoped memory for tpu_custom_call.1']
    #allocation5 [shape = 's32[1]{0}', space=sflag, size = 0x4, scoped, tag = 'scoped memory for tpu_custom_call.1']
    #allocation6 [shape = 'u8[98304]{0}', space=vmem, size = 0x18000, scoped, tag = 'input window, operand 2, single buffered']
    #allocation7 [shape = 's32[1]{0}', space=sflag, size = 0x4, scoped, tag = 'scoped memory for tpu_custom_call.1']
    #allocation8 [shape = 'u8[4096]{0}', space=vmem, size = 0x1000, scoped, tag = 'output window, operand 0, single buffered']
    %9 = vsyncpa [#allocation4], 0
    %10 = vsyncpa [#allocation7], 0
    %11 = vsyncpa [#allocation5], 0
    // Predicated region
    $region2: #{tpu_custom_call.1} parent=1 // pred_check
      _
    $region3: #{tpu_custom_call.1} parent=1 // pred_check_branch
      %13 = sbr.rel (0) target = $region5
    $region4: #{tpu_custom_call.1} parent=1 // pred_region
      _
    $region5: #{tpu_custom_call.1} parent=1 // pred_fallthru
      _
    // Predicated region
    $region6: #{tpu_custom_call.1} parent=1 // pred_check
      _
    $region7: #{tpu_custom_call.1} parent=1 // pred_check_branch
      %15 = sbr.rel (0) target = $region9
    $region8: #{tpu_custom_call.1} parent=1 // pred_region
      %s17 = ssub.s32 128, 128
      %18 = vsyncadd [#allocation4], %s17
      %s20 = sshll.u32 [#allocation3], 4
      %s21 = int_to_ptr.vmem [resolvable:$true] %s20
      %23 = dma.hbm_to_vmem [thread:$0]  %s1, 128, %s21, [#allocation4]
    $region9: #{tpu_custom_call.1} parent=1 // pred_fallthru
      _
    // Predicated region
    $region10: #{tpu_custom_call.1} parent=1 // pred_check
      _
    $region11: #{tpu_custom_call.1} parent=1 // pred_check_branch
      %25 = sbr.rel (0) target = $region13
    $region12: #{tpu_custom_call.1} parent=1 // pred_region
      %s27 = ssub.s32 3072, 3072
      %28 = vsyncadd [#allocation7], %s27
      %s29 = sshll.u32 [#allocation6], 4
      %s30 = int_to_ptr.vmem [resolvable:$true] %s29
      %35 = dma.hbm_to_vmem [thread:$0]  %s2, 3072, %s30, [#allocation7], 64, 64, 4
    $region13: #{tpu_custom_call.1} parent=1 // pred_fallthru
      _
    // Predicated region
    $region14: #{tpu_custom_call.1} parent=1 // pred_check
      _
    $region15: #{tpu_custom_call.1} parent=1 // pred_check_branch
      %37 = sbr.rel (0) target = $region17
    $region16: #{tpu_custom_call.1} parent=1 // pred_region
      %38 = dma.done [#allocation4], 128
    $region17: #{tpu_custom_call.1} parent=1 // pred_fallthru
      _
    // Predicated region
    $region18: #{tpu_custom_call.1} parent=1 // pred_check
      _
    $region19: #{tpu_custom_call.1} parent=1 // pred_check_branch
      %40 = sbr.rel (0) target = $region21
    $region20: #{tpu_custom_call.1} parent=1 // pred_region
      %41 = dma.done [#allocation7], 3072
    $region21: #{tpu_custom_call.1} parent=1 // pred_fallthru
      _
    %s43 = sld [smem:[#allocation2]]
    %p44 = scmp.eq.s32.totalorder 0, 0
    // Predicated region
    $region22: #{tpu_custom_call.1} parent=1 // pred_check
      %p45 = pneg %p44
    $region23: #{tpu_custom_call.1} parent=1 // pred_check_branch
      %47 = sbr.rel (%p45) target = $region25
    $region24: #{tpu_custom_call.1} parent=1 // pred_region
      %v48 = vld [vmem:[#allocation3] sm:$0xff]
      %49 = vst [vmem:[#allocation8] sm:$0xff] %v48
    $region25: #{tpu_custom_call.1} parent=1 // pred_fallthru
      _
    %v50 = vld [vmem:[#allocation8] sm:$0xff]
    %v51 = vld [vmem:[#allocation6] sm:$0xf]
    %v52 = vld [vmem:[#allocation6 + $0x4] sm:$0xf]
    %v53 = vld [vmem:[#allocation6 + $0x8] sm:$0xf]
    %v54 = vld [vmem:[#allocation6 + $0xc] sm:$0xf]
    %v55 = vld [vmem:[#allocation6 + $0x10] sm:$0xf]
    %v56 = vld [vmem:[#allocation6 + $0x14] sm:$0xf]
    %v57 = vld [vmem:[#allocation6 + $0x18] sm:$0xf]
    %v58 = vld [vmem:[#allocation6 + $0x1c] sm:$0xf]
    %v59 = vld [vmem:[#allocation6 + $0x20] sm:$0xf]
    %v60 = vld [vmem:[#allocation6 + $0x24] sm:$0xf]
    %v61 = vld [vmem:[#allocation6 + $0x28] sm:$0xf]
    %v62 = vld [vmem:[#allocation6 + $0x2c] sm:$0xf]
    %v63 = vld [vmem:[#allocation6 + $0x30] sm:$0xf]
    %v64 = vld [vmem:[#allocation6 + $0x34] sm:$0xf]
    %v65 = vld [vmem:[#allocation6 + $0x38] sm:$0xf]
    %v66 = vld [vmem:[#allocation6 + $0x3c] sm:$0xf]
    %v67 = vpack.c.bf16 %v50, %v50
    %v84 = vunpack.c.l.b16 %v51
    %v85 = vunpack.c.l.b16 %v52
    %v86 = vunpack.c.l.b16 %v53
    %v87 = vunpack.c.l.b16 %v54
    %v88 = vunpack.c.l.b16 %v55
    %v89 = vunpack.c.l.b16 %v56
    %v90 = vunpack.c.l.b16 %v57
    %v91 = vunpack.c.l.b16 %v58
    %v92 = vunpack.c.l.b16 %v59
    %v93 = vunpack.c.l.b16 %v60
    %v94 = vunpack.c.l.b16 %v61
    %v95 = vunpack.c.l.b16 %v62
    %v96 = vunpack.c.l.b16 %v63
    %v97 = vunpack.c.l.b16 %v64
    %v98 = vunpack.c.l.b16 %v65
    %v99 = vunpack.c.l.b16 %v66
    %v100 = vpack.c.b16 %v85, %v84
    %v101 = vpack.c.b16 %v87, %v86
    %v102 = vpack.c.b16 %v89, %v88
    %v103 = vpack.c.b16 %v91, %v90
    %v104 = vpack.c.b16 %v93, %v92
    %v105 = vpack.c.b16 %v95, %v94
    %v106 = vpack.c.b16 %v97, %v96
    %v107 = vpack.c.b16 %v99, %v98
    %116 = vmatprep.subr.bf16.mxu0 0
    %117 = vmatpush1.bf16.xpose.msra.mxu0 %v107
    %118 = vmatprep.subr.bf16.mxu0 0
    %119 = vmatpush1.bf16.xpose.msra.mxu0 %v106
    %120 = vmatprep.subr.bf16.mxu0 0
    %121 = vmatpush1.bf16.xpose.msra.mxu0 %v105
    %122 = vmatprep.subr.bf16.mxu0 0
    %123 = vmatpush1.bf16.xpose.msra.mxu0 %v104
    %124 = vmatprep.subr.bf16.mxu0 0
    %125 = vmatpush1.bf16.xpose.msra.mxu0 %v103
    %126 = vmatprep.subr.bf16.mxu0 0
    %127 = vmatpush1.bf16.xpose.msra.mxu0 %v102
    %128 = vmatprep.subr.bf16.mxu0 0
    %129 = vmatpush1.bf16.xpose.msra.mxu0 %v101
    %130 = vmatprep.subr.bf16.mxu0 0
    %131 = vmatpush1.bf16.xpose.msra.mxu0 %v100
    %132 = vmatprep.subr.bf16.mxu0 0
    %133 = vmatpush2.bf16.xpose.msra.mxu0 0
    %134 = vmatprep.subr.bf16.mxu0 0
    %135 = vmatpush2.bf16.xpose.msra.mxu0 0
    %136 = vmatprep.subr.bf16.mxu0 0
    %137 = vmatpush2.bf16.xpose.msra.mxu0 0
    %138 = vmatprep.subr.bf16.mxu0 0
    %139 = vmatpush2.bf16.xpose.msra.mxu0 0
    %140 = vmatprep.subr.bf16.mxu0 0
    %141 = vmatpush2.bf16.xpose.msra.mxu0 0
    %142 = vmatprep.subr.bf16.mxu0 0
    %143 = vmatpush2.bf16.xpose.msra.mxu0 0
    %144 = vmatprep.subr.bf16.mxu0 0
    %145 = vmatpush2.bf16.xpose.msra.mxu0 0
    %146 = vmatprep.subr.bf16.mxu0 0
    %147 = vmatpush2.bf16.xpose.msra.mxu0 0
    %148 = vmatprep.mubr.bf16.mxu0 0
    %149 = vmatmul.mubr.bf16.gmra.mxu0 %v67
    %v150 = vpop.f32.mrf.mxu0
    %v151 = vadd.f32 0.0, %v150
    %v152 = vpop.f32.mrf.mxu0
    %v153 = vpop.f32.mrf.mxu0
    %v154 = vpop.f32.mrf.mxu0
    %155 = vdwg.mxu0
    %v156 = vstv %s43
    %v157 = vsub.f32 %v151, %v156
    %v158 = vmax.f32 %v157, 0.0
    %v159 = vsub.f32 0.0, %v151
    %v160 = vsub.f32 %v159, %v156
    %v161 = vmax.f32 %v160, 0.0
    %v162 = vsub.f32 %v158, %v161
    %s163 = scalar_lea.vmem [#allocation6], 64
    %v164 = vld [vmem:[%s163] sm:$0xf]
    %v165 = vld [vmem:[%s163 + $0x4] sm:$0xf]
    %v166 = vld [vmem:[%s163 + $0x8] sm:$0xf]
    %v167 = vld [vmem:[%s163 + $0xc] sm:$0xf]
    %v168 = vld [vmem:[%s163 + $0x10] sm:$0xf]
    %v169 = vld [vmem:[%s163 + $0x14] sm:$0xf]
    %v170 = vld [vmem:[%s163 + $0x18] sm:$0xf]
    %v171 = vld [vmem:[%s163 + $0x1c] sm:$0xf]
    %v172 = vld [vmem:[%s163 + $0x20] sm:$0xf]
    %v173 = vld [vmem:[%s163 + $0x24] sm:$0xf]
    %v174 = vld [vmem:[%s163 + $0x28] sm:$0xf]
    %v175 = vld [vmem:[%s163 + $0x2c] sm:$0xf]
    %v176 = vld [vmem:[%s163 + $0x30] sm:$0xf]
    %v177 = vld [vmem:[%s163 + $0x34] sm:$0xf]
    %v178 = vld [vmem:[%s163 + $0x38] sm:$0xf]
    %v179 = vld [vmem:[%s163 + $0x3c] sm:$0xf]
    %v180 = vpack.c.bf16 %v162, %v162
    %v197 = vunpack.c.l.b16 %v164
    %v198 = vunpack.c.l.b16 %v165
    %v199 = vunpack.c.l.b16 %v166
    %v200 = vunpack.c.l.b16 %v167
    %v201 = vunpack.c.l.b16 %v168
    %v202 = vunpack.c.l.b16 %v169
    %v203 = vunpack.c.l.b16 %v170
    %v204 = vunpack.c.l.b16 %v171
    %v205 = vunpack.c.l.b16 %v172
    %v206 = vunpack.c.l.b16 %v173
    %v207 = vunpack.c.l.b16 %v174
    %v208 = vunpack.c.l.b16 %v175
    %v209 = vunpack.c.l.b16 %v176
    %v210 = vunpack.c.l.b16 %v177
    %v211 = vunpack.c.l.b16 %v178
    %v212 = vunpack.c.l.b16 %v179
    %v213 = vpack.c.b16 %v198, %v197
    %v214 = vpack.c.b16 %v200, %v199
    %v215 = vpack.c.b16 %v202, %v201
    %v216 = vpack.c.b16 %v204, %v203
    %v217 = vpack.c.b16 %v206, %v205
    %v218 = vpack.c.b16 %v208, %v207
    %v219 = vpack.c.b16 %v210, %v209
    %v220 = vpack.c.b16 %v212, %v211
    %229 = vmatprep.subr.bf16.mxu0 0
    %230 = vmatpush1.bf16.xpose.msra.mxu0 %v220
    %231 = vmatprep.subr.bf16.mxu0 0
    %232 = vmatpush1.bf16.xpose.msra.mxu0 %v219
    %233 = vmatprep.subr.bf16.mxu0 0
    %234 = vmatpush1.bf16.xpose.msra.mxu0 %v218
    %235 = vmatprep.subr.bf16.mxu0 0
    %236 = vmatpush1.bf16.xpose.msra.mxu0 %v217
    %237 = vmatprep.subr.bf16.mxu0 0
    %238 = vmatpush1.bf16.xpose.msra.mxu0 %v216
    %239 = vmatprep.subr.bf16.mxu0 0
    %240 = vmatpush1.bf16.xpose.msra.mxu0 %v215
    %241 = vmatprep.subr.bf16.mxu0 0
    %242 = vmatpush1.bf16.xpose.msra.mxu0 %v214
    %243 = vmatprep.subr.bf16.mxu0 0
    %244 = vmatpush1.bf16.xpose.msra.mxu0 %v213
    %245 = vmatprep.subr.bf16.mxu0 0
    %246 = vmatpush2.bf16.xpose.msra.mxu0 0
    %247 = vmatprep.subr.bf16.mxu0 0
    %248 = vmatpush2.bf16.xpose.msra.mxu0 0
    %249 = vmatprep.subr.bf16.mxu0 0
    %250 = vmatpush2.bf16.xpose.msra.mxu0 0
    %251 = vmatprep.subr.bf16.mxu0 0
    %252 = vmatpush2.bf16.xpose.msra.mxu0 0
    %253 = vmatprep.subr.bf16.mxu0 0
    %254 = vmatpush2.bf16.xpose.msra.mxu0 0
    %255 = vmatprep.subr.bf16.mxu0 0
    %256 = vmatpush2.bf16.xpose.msra.mxu0 0
    %257 = vmatprep.subr.bf16.mxu0 0
    %258 = vmatpush2.bf16.xpose.msra.mxu0 0
    %259 = vmatprep.subr.bf16.mxu0 0
    %260 = vmatpush2.bf16.xpose.msra.mxu0 0
    %261 = vmatprep.mubr.bf16.mxu0 0
    %262 = vmatmul.mubr.bf16.gmra.mxu0 %v180
    %v263 = vpop.f32.mrf.mxu0
    %v264 = vadd.f32 0.0, %v263
    %v265 = vpop.f32.mrf.mxu0
    %v266 = vpop.f32.mrf.mxu0
    %v267 = vpop.f32.mrf.mxu0
    %268 = vdwg.mxu0
    %v269 = vsub.f32 %v264, %v156
    %v270 = vmax.f32 %v269, 0.0
    %v271 = vsub.f32 0.0, %v264
    %v272 = vsub.f32 %v271, %v156
    %v273 = vmax.f32 %v272, 0.0
    %v274 = vsub.f32 %v270, %v273
    %s275 = scalar_lea.vmem [#allocation6], 128
    %v276 = vld [vmem:[%s275] sm:$0xf]
    %v277 = vld [vmem:[%s275 + $0x4] sm:$0xf]
    %v278 = vld [vmem:[%s275 + $0x8] sm:$0xf]
    %v279 = vld [vmem:[%s275 + $0xc] sm:$0xf]
    %v280 = vld [vmem:[%s275 + $0x10] sm:$0xf]
    %v281 = vld [vmem:[%s275 + $0x14] sm:$0xf]
    %v282 = vld [vmem:[%s275 + $0x18] sm:$0xf]
    %v283 = vld [vmem:[%s275 + $0x1c] sm:$0xf]
    %v284 = vld [vmem:[%s275 + $0x20] sm:$0xf]
    %v285 = vld [vmem:[%s275 + $0x24] sm:$0xf]
    %v286 = vld [vmem:[%s275 + $0x28] sm:$0xf]
    %v287 = vld [vmem:[%s275 + $0x2c] sm:$0xf]
    %v288 = vld [vmem:[%s275 + $0x30] sm:$0xf]
    %v289 = vld [vmem:[%s275 + $0x34] sm:$0xf]
    %v290 = vld [vmem:[%s275 + $0x38] sm:$0xf]
    %v291 = vld [vmem:[%s275 + $0x3c] sm:$0xf]
    %v292 = vpack.c.bf16 %v274, %v274
    %v309 = vunpack.c.l.b16 %v276
    %v310 = vunpack.c.l.b16 %v277
    %v311 = vunpack.c.l.b16 %v278
    %v312 = vunpack.c.l.b16 %v279
    %v313 = vunpack.c.l.b16 %v280
    %v314 = vunpack.c.l.b16 %v281
    %v315 = vunpack.c.l.b16 %v282
    %v316 = vunpack.c.l.b16 %v283
    %v317 = vunpack.c.l.b16 %v284
    %v318 = vunpack.c.l.b16 %v285
    %v319 = vunpack.c.l.b16 %v286
    %v320 = vunpack.c.l.b16 %v287
    %v321 = vunpack.c.l.b16 %v288
    %v322 = vunpack.c.l.b16 %v289
    %v323 = vunpack.c.l.b16 %v290
    %v324 = vunpack.c.l.b16 %v291
    %v325 = vpack.c.b16 %v310, %v309
    %v326 = vpack.c.b16 %v312, %v311
    %v327 = vpack.c.b16 %v314, %v313
    %v328 = vpack.c.b16 %v316, %v315
    %v329 = vpack.c.b16 %v318, %v317
    %v330 = vpack.c.b16 %v320, %v319
    %v331 = vpack.c.b16 %v322, %v321
    %v332 = vpack.c.b16 %v324, %v323
    %341 = vmatprep.subr.bf16.mxu0 0
    %342 = vmatpush1.bf16.xpose.msra.mxu0 %v332
    %343 = vmatprep.subr.bf16.mxu0 0
    %344 = vmatpush1.bf16.xpose.msra.mxu0 %v331
    %345 = vmatprep.subr.bf16.mxu0 0
    %346 = vmatpush1.bf16.xpose.msra.mxu0 %v330
    %347 = vmatprep.subr.bf16.mxu0 0
    %348 = vmatpush1.bf16.xpose.msra.mxu0 %v329
    %349 = vmatprep.subr.bf16.mxu0 0
    %350 = vmatpush1.bf16.xpose.msra.mxu0 %v328
    %351 = vmatprep.subr.bf16.mxu0 0
    %352 = vmatpush1.bf16.xpose.msra.mxu0 %v327
    %353 = vmatprep.subr.bf16.mxu0 0
    %354 = vmatpush1.bf16.xpose.msra.mxu0 %v326
    %355 = vmatprep.subr.bf16.mxu0 0
    %356 = vmatpush1.bf16.xpose.msra.mxu0 %v325
    %357 = vmatprep.subr.bf16.mxu0 0
    %358 = vmatpush2.bf16.xpose.msra.mxu0 0
    %359 = vmatprep.subr.bf16.mxu0 0
    %360 = vmatpush2.bf16.xpose.msra.mxu0 0
    %361 = vmatprep.subr.bf16.mxu0 0
    %362 = vmatpush2.bf16.xpose.msra.mxu0 0
    %363 = vmatprep.subr.bf16.mxu0 0
    %364 = vmatpush2.bf16.xpose.msra.mxu0 0
    %365 = vmatprep.subr.bf16.mxu0 0
    %366 = vmatpush2.bf16.xpose.msra.mxu0 0
    %367 = vmatprep.subr.bf16.mxu0 0
    %368 = vmatpush2.bf16.xpose.msra.mxu0 0
    %369 = vmatprep.subr.bf16.mxu0 0
    %370 = vmatpush2.bf16.xpose.msra.mxu0 0
    %371 = vmatprep.subr.bf16.mxu0 0
    %372 = vmatpush2.bf16.xpose.msra.mxu0 0
    %373 = vmatprep.mubr.bf16.mxu0 0
    %374 = vmatmul.mubr.bf16.gmra.mxu0 %v292
    %v375 = vpop.f32.mrf.mxu0
    %v376 = vadd.f32 0.0, %v375
    %v377 = vpop.f32.mrf.mxu0
    %v378 = vpop.f32.mrf.mxu0
    %v379 = vpop.f32.mrf.mxu0
    %380 = vdwg.mxu0
    %v381 = vsub.f32 %v376, %v156
    %v382 = vmax.f32 %v381, 0.0
    %v383 = vsub.f32 0.0, %v376
    %v384 = vsub.f32 %v383, %v156
    %v385 = vmax.f32 %v384, 0.0
    %v386 = vsub.f32 %v382, %v385
    %387 = vst [vmem:[#allocation8] sm:$0xff] %v386
    // Predicated region
    $region26: #{tpu_custom_call.1} parent=1 // pred_check
      _
    $region27: #{tpu_custom_call.1} parent=1 // pred_check_branch
      %389 = sbr.rel (0) target = $region29
    $region28: #{tpu_custom_call.1} parent=1 // pred_region
      %s391 = ssub.s32 128, 128
      %392 = vsyncadd [#allocation5], %s391
      %s394 = sshll.u32 [#allocation8], 4
      %s395 = int_to_ptr.vmem [resolvable:$true] %s394
      %397 = dma.vmem_to_hbm [thread:$0]  %s395, 128, %s3, [#allocation5]
    $region29: #{tpu_custom_call.1} parent=1 // pred_fallthru
      _
    // Predicated region
    $region30: #{tpu_custom_call.1} parent=1 // pred_check
      _
    $region31: #{tpu_custom_call.1} parent=1 // pred_check_branch
      %399 = sbr.rel (0) target = $region33
    $region32: #{tpu_custom_call.1} parent=1 // pred_region
      %400 = dma.done [#allocation5], 128
    $region33: #{tpu_custom_call.1} parent=1 // pred_fallthru
      _
    %401 = vsyncpa [#allocation4], 1
    %402 = vsyncpa [#allocation7], 1
    %403 = vsyncpa [#allocation5], 1

</llo_original>
